<compile_context>
chip_gen: v7x
topology: tpu7x:2x2x1
jax: 0.10.0
libtpu: 0.0.40
codegen_flags: <defaults>
</compile_context>

<pallas_src>
import functools

import jax
import jax.numpy as jnp
from jax.experimental import pallas as pl
from jax.experimental.pallas import tpu as pltpu


def _round_up(x, m):
    return ((x + m - 1) // m) * m


def _vmem_capacity_bytes():
    try:
        cap = getattr(pltpu.get_tpu_info(), "vmem_capacity_bytes", None)
        if cap:
            return int(cap)
    except Exception:
        pass
    return 64 * 2**20      # conservative default (v7x per-TC VMEM)


def _patch_embed_kernel(p_ref, w_ref, posb_ref, o_ref):
    # p_ref: (tn, tk) bf16       w_ref: (tk, Lp) bf16
    # posb_ref: (tn, Lp) f32     o_ref: (tn, Lp) f32
    # o_ref's block index is constant across the K grid axis (last, arbitrary),
    # so it stays VMEM-resident and doubles as the accumulator (no scratch).
    k = pl.program_id(2)
    acc = jnp.dot(p_ref[...], w_ref[...], preferred_element_type=jnp.float32)

    @pl.when(k == 0)
    def _():
        o_ref[...] = acc + posb_ref[...]

    @pl.when(k > 0)
    def _():
        o_ref[...] += acc


def _pick_tiles(Ntot, Kp, Lp, vmem_cap):
    budget = int(0.75 * vmem_cap)          # ~48 MiB on v7x, ~96 MiB on v5e/v6e

    # Weight tiling: keep the whole (Kp, Lp) weight resident in VMEM whenever it
    # fits (the normal case for patch embeddings) -> fetched exactly once.
    # Otherwise stream lane-aligned K chunks without adding zero columns.
    w_budget = 16 * 2**20 if vmem_cap <= 64 * 2**20 else 40 * 2**20
    if Kp * Lp * 2 <= w_budget:
        tk = Kp
    else:
        tk = next(t for t in (512, 384, 256, 128) if Kp % t == 0)

    def vmem_need(tn):
        return (2 * tn * tk * 2        # patches block (bf16, double-buffered)
                + 2 * tk * Lp * 2      # weight block(s) (bf16)
                + 2 * tn * Lp * 4      # class/bias/pos block (f32)
                + 2 * tn * Lp * 4)     # output block / accumulator (f32)

    # Seq tile: multiple of 16 (bf16 packs 16 sublanes per vreg), as large as the
    # VMEM budget allows, never larger than the (16-rounded) sequence length.
    # Note: 256 already saturates v5e's 128-wide MXU; larger tiles there only
    # reduce per-grid-step overhead, which is harmless for this mem-bound kernel.
    tn_cap = 512 if vmem_cap <= 64 * 2**20 else 1024
    tn = _round_up(min(tn_cap, _round_up(Ntot, 16)), 16)
    while tn > 16 and vmem_need(tn) > budget // 2:
        tn = _round_up(tn // 2, 16)

    vmem_limit = int(min(max(2 * vmem_need(tn), 16 * 2**20), budget))
    return tn, tk, vmem_limit


@functools.partial(jax.jit, static_argnums=(5,))
def input_embedding_forward(x, conv_w, conv_b, class_token, pos_embedding, patch_size):
    """x: (B, C, D, H, W) f32.  Returns (B, N+1, L) f32."""
    B, C, D, H, W = x.shape
    p = patch_size
    nd, nh, nw = D // p, H // p, W // p
    N = nd * nh * nw
    Ntot = N + 1                       # class token + patches
    L = conv_w.shape[0]
    K = C * p * p * p

    Kp = _round_up(K, 128)
    Lp = _round_up(L, 128)
    tn, tk, vmem_limit = _pick_tiles(Ntot, Kp, Lp, _vmem_capacity_bytes())
    Ntot_pad = _round_up(Ntot, tn)

    # im2col for Conv3d(kernel=stride=p): seq in (d, h, w) order, K columns in
    # (c, kd, kh, kw) order (Conv3d weight layout).  Cast to bf16 *before* the
    # transpose so patches are materialized once, in bf16.  One zero row is
    # prepended per batch (the class-token slot) plus seq/K padding.
    xr = x.astype(jnp.bfloat16).reshape(B, C, nd, p, nh, p, nw, p)
    xr = jnp.transpose(xr, (0, 2, 4, 6, 1, 3, 5, 7)).reshape(B, N, K)
    patches = jnp.pad(xr, ((0, 0), (1, Ntot_pad - Ntot), (0, Kp - K)))

    w_mat = conv_w.reshape(L, K).T.astype(jnp.bfloat16)          # (K, L)
    w_mat = jnp.pad(w_mat, ((0, Kp - K), (0, Lp - L)))           # (Kp, Lp)

    # Additive row term, shape (Ntot, L): row 0 = class token (its patch row is
    # all-zero, so the kernel emits exactly the class token); rows 1..N =
    # conv bias + positional embedding.  Tiny array -> no (M, L) tiling.
    posb = jnp.concatenate(
        [class_token.reshape(1, L).astype(jnp.float32),
         conv_b.reshape(1, L).astype(jnp.float32)
         + pos_embedding.reshape(N, L).astype(jnp.float32)],
        axis=0)
    posb = jnp.pad(posb, ((0, Ntot_pad - Ntot), (0, Lp - L)))    # (Ntot_pad, Lp)

    grid = (B, Ntot_pad // tn, Kp // tk)

    out = pl.pallas_call(
        _patch_embed_kernel,
        out_shape=jax.ShapeDtypeStruct((B, Ntot_pad, Lp), jnp.float32),
        grid_spec=pltpu.PrefetchScalarGridSpec(
            num_scalar_prefetch=0,
            grid=grid,
            in_specs=[
                # patches: batch dim squeezed out of the kernel ref
                pl.BlockSpec((None, tn, tk), lambda b, n, k: (b, n, k)),
                # weights: constant block index when tk == Kp -> VMEM-resident,
                # DMA'd exactly once for the whole kernel
                pl.BlockSpec((tk, Lp), lambda b, n, k: (k, 0)),
                # class-token / bias+pos rows: depends only on the seq axis
                pl.BlockSpec((tn, Lp), lambda b, n, k: (n, 0)),
            ],
            out_specs=pl.BlockSpec((None, tn, Lp), lambda b, n, k: (b, n, 0)),
        ),
        compiler_params=pltpu.CompilerParams(
            dimension_semantics=("parallel", "parallel", "arbitrary"),
            vmem_limit_bytes=vmem_limit,
        ),
    )(patches, w_mat, posb)

    # Crop padding.  The class token is already in row 0, so there is no
    # post-kernel concatenate pass; this slice fuses into the downstream
    # consumer in a real model.
    # TODO(synk): training-mode nn.Dropout(0.1) not implemented (eval identity).
    return out[:, :Ntot, :L]


if __name__ == "__main__":
    # Small shapes consistent with the module (image divisible by patch).
    image_size, patch_size, n_channels, latent_size = 8, 4, 2, 128
    batch = 2
    num_patches = (image_size // patch_size) ** 3                # 8

    key = jax.random.PRNGKey(0)
    k_x, k_w, k_b, k_cls, k_pos = jax.random.split(key, 5)

    x = jax.random.normal(
        k_x, (batch, n_channels, image_size, image_size, image_size), jnp.float32)
    conv_w = jax.random.normal(
        k_w, (latent_size, n_channels, patch_size, patch_size, patch_size),
        jnp.float32) * 0.05
    conv_b = jax.random.normal(k_b, (latent_size,), jnp.float32) * 0.05
    class_token = jax.random.normal(k_cls, (1, 1, latent_size), jnp.float32)
    pos_embedding = jax.random.normal(
        k_pos, (1, num_patches, latent_size), jnp.float32)

    out = input_embedding_forward(
        x, conv_w, conv_b, class_token, pos_embedding, patch_size)
    out = jax.block_until_ready(out)

    # Pure-JAX f32 reference (Conv3d with stride == kernel via dot).
    p = patch_size
    nd = image_size // p
    xr = x.reshape(batch, n_channels, nd, p, nd, p, nd, p)
    xr = jnp.transpose(xr, (0, 2, 4, 6, 1, 3, 5, 7)).reshape(batch, num_patches, -1)
    ref_patches = xr @ conv_w.reshape(latent_size, -1).T + conv_b
    ref_patches = ref_patches + pos_embedding
    ref = jnp.concatenate(
        [jnp.broadcast_to(class_token, (batch, 1, latent_size)), ref_patches],
        axis=1)

    assert out.shape == (batch, num_patches + 1, latent_size), out.shape
    # bf16 matmul inputs with f32 accumulation -> loosened tolerance.
    assert jnp.allclose(out, ref, atol=5e-2, rtol=5e-2), float(
        jnp.max(jnp.abs(out - ref)))
    print("KERNEL_OK")
</pallas_src>

<mosaic_0001>
module attributes {stable_mosaic.version = 11 : i64} {
  func.func @_patch_embed_kernel(%arg0: i32, %arg1: i32, %arg2: i32, %arg3: memref<1x16x128xbf16, #tpu.memory_space<vmem>>, %arg4: memref<128x128xbf16, #tpu.memory_space<vmem>>, %arg5: memref<16x128xf32, #tpu.memory_space<vmem>>, %arg6: memref<1x16x128xf32, #tpu.memory_space<vmem>>) attributes {dimension_semantics = [#tpu.dimension_semantics<parallel>, #tpu.dimension_semantics<parallel>, #tpu.dimension_semantics<arbitrary>], iteration_bounds = array<i64: 2, 1, 1>, scalar_prefetch = 0 : i64, scratch_operands = 0 : i64, tpu.core_type = #tpu.core_type<tc>, window_params = [{transform_indices = @transform_0, window_bounds = array<i64: 1, 16, 128>}, {transform_indices = @transform_1, window_bounds = array<i64: 128, 128>}, {transform_indices = @transform_2, window_bounds = array<i64: 16, 128>}, {transform_indices = @transform_3, window_bounds = array<i64: 1, 16, 128>}]} {
    %c0 = arith.constant 0 : index
    %c0_0 = arith.constant 0 : index
    %c0_1 = arith.constant 0 : index
    %0 = vector.load %arg3[%c0, %c0_0, %c0_1] : memref<1x16x128xbf16, #tpu.memory_space<vmem>>, vector<1x16x128xbf16>
    %1 = vector.shape_cast %0 : vector<1x16x128xbf16> to vector<16x128xbf16>
    %c0_2 = arith.constant 0 : index
    %c0_3 = arith.constant 0 : index
    %2 = vector.load %arg4[%c0_2, %c0_3] : memref<128x128xbf16, #tpu.memory_space<vmem>>, vector<128x128xbf16>
    %cst = arith.constant dense<0.000000e+00> : vector<16x128xf32>
    %3 = tpu.matmul %1, %2, %cst {dimension_numbers = #tpu.dot_dimension_numbers<[1], [0], [0], [1], [0, 0, 1, 1], [], []>} : vector<16x128xbf16>, vector<128x128xbf16>, vector<16x128xf32> -> vector<16x128xf32>
    %c0_i32 = arith.constant 0 : i32
    %4 = arith.cmpi eq, %arg2, %c0_i32 : i32
    %5 = arith.extui %4 : i1 to i32
    %c0_i32_4 = arith.constant 0 : i32
    %6 = arith.cmpi ne, %5, %c0_i32_4 : i32
    scf.if %6 {
      %c0_7 = arith.constant 0 : index
      %c0_8 = arith.constant 0 : index
      %10 = vector.load %arg5[%c0_7, %c0_8] : memref<16x128xf32, #tpu.memory_space<vmem>>, vector<16x128xf32>
      %11 = arith.addf %3, %10 : vector<16x128xf32>
      %c0_9 = arith.constant 0 : index
      %c0_10 = arith.constant 0 : index
      %c0_11 = arith.constant 0 : index
      %12 = vector.load %arg6[%c0_9, %c0_10, %c0_11] : memref<1x16x128xf32, #tpu.memory_space<vmem>>, vector<1x16x128xf32>
      %13 = vector.shape_cast %12 : vector<1x16x128xf32> to vector<16x128xf32>
      %14 = vector.shape_cast %11 : vector<16x128xf32> to vector<1x16x128xf32>
      tpu.vector_store %arg6[%c0_9, %c0_10, %c0_11], %14 {strides = array<i32>} : memref<1x16x128xf32, #tpu.memory_space<vmem>>, vector<1x16x128xf32>,
    } else {
    }
    %c0_i32_5 = arith.constant 0 : i32
    %7 = arith.cmpi sgt, %arg2, %c0_i32_5 : i32
    %8 = arith.extui %7 : i1 to i32
    %c0_i32_6 = arith.constant 0 : i32
    %9 = arith.cmpi ne, %8, %c0_i32_6 : i32
    scf.if %9 {
      %c0_7 = arith.constant 0 : index
      %c0_8 = arith.constant 0 : index
      %c0_9 = arith.constant 0 : index
      %10 = vector.load %arg6[%c0_7, %c0_8, %c0_9] : memref<1x16x128xf32, #tpu.memory_space<vmem>>, vector<1x16x128xf32>
      %11 = vector.shape_cast %10 : vector<1x16x128xf32> to vector<16x128xf32>
      %12 = arith.addf %11, %3 : vector<16x128xf32>
      %c0_10 = arith.constant 0 : index
      %c0_11 = arith.constant 0 : index
      %c0_12 = arith.constant 0 : index
      %13 = vector.load %arg6[%c0_10, %c0_11, %c0_12] : memref<1x16x128xf32, #tpu.memory_space<vmem>>, vector<1x16x128xf32>
      %14 = vector.shape_cast %13 : vector<1x16x128xf32> to vector<16x128xf32>
      %15 = vector.shape_cast %12 : vector<16x128xf32> to vector<1x16x128xf32>
      tpu.vector_store %arg6[%c0_10, %c0_11, %c0_12], %15 {strides = array<i32>} : memref<1x16x128xf32, #tpu.memory_space<vmem>>, vector<1x16x128xf32>,
    } else {
    }
    return
  }
  func.func @transform_0(%arg0: i32, %arg1: i32, %arg2: i32) -> (i32, i32, i32) {
    %c0_i32 = arith.constant 0 : i32
    return %arg0, %arg1, %arg2 : i32, i32, i32
  }
  func.func @transform_1(%arg0: i32, %arg1: i32, %arg2: i32) -> (i32, i32) {
    %c0_i32 = arith.constant 0 : i32
    %c0_i32_0 = arith.constant 0 : i32
    return %arg2, %c0_i32 : i32, i32
  }
  func.func @transform_2(%arg0: i32, %arg1: i32, %arg2: i32) -> (i32, i32) {
    %c0_i32 = arith.constant 0 : i32
    %c0_i32_0 = arith.constant 0 : i32
    return %arg1, %c0_i32 : i32, i32
  }
  func.func @transform_3(%arg0: i32, %arg1: i32, %arg2: i32) -> (i32, i32, i32) {
    %c0_i32 = arith.constant 0 : i32
    %c0_i32_0 = arith.constant 0 : i32
    return %arg0, %arg1, %c0_i32 : i32, i32, i32
  }
}

</mosaic_0001>

<llo_original>
// kernel: input_embedding_forward.1
$region0: #{input_embedding_forward.1}
  #allocation0 [shape = 'u32[]', space=smem, size = 0x4, offset = 0x4, fixed_abs, tag = 'smem constant byte address 0x4 - core index']
  #allocation1 [shape = 'u32[144,128]{1,0:T(1,128)}', space=vmem, size = 0x12000, scoped, tag = 'internal scratch']
  %s0 = inlined_call_operand.vmem [shape: bf16[2,16,128], index: 0, kind: input, shape index: {}]
  %s1 = inlined_call_operand.vmem [shape: bf16[128,128], index: 1, kind: input, shape index: {}]
  %s2 = inlined_call_operand.vmem [shape: f32[16,128], index: 2, kind: input, shape index: {}]
  %s3 = inlined_call_operand.vmem [shape: f32[2,16,128], index: 3, kind: output, shape index: {}]
  %s4 = sld [smem:[#allocation0]]
  $region53: #{input_embedding_forward.1} parent=0
    _
  %s6 = ssub.s32 1, %s4
  %s7 = scalar_select 0, %s6, %s4
  loop: start=0, step=1, limit=4
  $region2: #{input_embedding_forward.1} parent=0 // loop_pre_header
    _
  $region3: #{input_embedding_forward.1} parent=0 // loop_header
    %s9 = sphi 0, %s13
    %p10 = scmp.ge.s32.totalorder %s9, 4
    %s16 = sphi 0, %s35
    %s17 = sphi 0, %s31
    %s18 = sphi 0, %s27
    %s19 = sphi 0, %s16
    %s20 = sphi 0, %s17
    %s21 = sphi 0, %s18
    %s22 = sphi 0, %s19
    %s23 = sphi 0, %s20
    %s24 = sphi 0, %s21
    %s42 = sphi 0, %s44
    %s45 = sphi 0, %s42
    %s46 = sphi 0, %s45
    %s62 = sphi 0, %s46
    %s68 = sphi 0, %s70
    %s71 = sphi 0, %s68
    %s72 = sphi 0, %s71
    %s88 = sphi 0, %s72
    %s94 = sphi 0, %s96
    %s97 = sphi 0, %s94
    %s98 = sphi 0, %s97
    %s114 = sphi 0, %s98
    %s122 = sphi 0, %s124
    %s125 = sphi 0, %s122
    %s126 = sphi 0, %s125
    %s142 = sphi 0, %s126
  $region4: #{input_embedding_forward.1} parent=0 // loop_header_branch
    %12 = sbr.rel (%p10) target = $region8
  $region5: #{input_embedding_forward.1} parent=0 // loop_body
    %s14 = ssub.s32 %s9, 1
    %s15 = ssub.s32 %s9, 2
    %s25 = sadd.s32 1, %s18
    %p26 = scmp.ge.s32.totalorder %s25, 1
    %s27 = scalar_select %p26, 0, %s25
    %s28 = sadd.s32 1, %s17
    %s29 = scalar_select %p26, %s28, %s17
    %p30 = scmp.ge.s32.totalorder %s29, 1
    %s31 = scalar_select %p30, 0, %s29
    %s32 = sadd.s32 1, %s16
    %s33 = scalar_select %p30, %s32, %s16
    %p34 = scmp.ge.s32.totalorder %s33, 2
    %s35 = scalar_select %p34, 0, %s33
    %s36 = ssub.s32 %s16, %s35
    %s37 = ssub.s32 %s17, %s31
    %s38 = sor.u32 %s36, %s37
    %s39 = ssub.s32 %s18, %s27
    %s40 = sor.u32 %s38, %s39
    %p41 = scmp.eq.s32.totalorder %s40, 0
    %s43 = sadd.s32 %s42, 1
    %s44 = scalar_select %p41, %s42, %s43
    %p47 = pneg %p41
    %p48 = scmp.eq.s32.totalorder %s9, 1
    %p49 = por %p47, %p48
    %p50 = scmp.ne.s32.totalorder %s42, %s45
    %p51 = scmp.eq.s32.totalorder %s9, 0
    %p52 = por %p50, %p51
    %p53 = scmp.ne.s32.totalorder %s42, %s45
    %p54 = scmp.eq.s32.totalorder %s14, 1
    %p55 = por %p53, %p54
    %p56 = scmp.ne.s32.totalorder %s45, %s46
    %p57 = scmp.eq.s32.totalorder %s14, 0
    %p58 = por %p56, %p57
    %p59 = scmp.ne.s32.totalorder %s45, %s46
    %p60 = scmp.eq.s32.totalorder %s15, 1
    %p61 = por %p59, %p60
    %p63 = scmp.ne.s32.totalorder %s46, %s62
    %p64 = scmp.eq.s32.totalorder %s15, 0
    %p65 = por %p63, %p64
    %s66 = ssub.s32 %s18, %s27
    %p67 = scmp.eq.s32.totalorder %s66, 0
    %s69 = sadd.s32 %s68, 1
    %s70 = scalar_select %p67, %s68, %s69
    %p73 = pneg %p67
    %p74 = scmp.eq.s32.totalorder %s9, 1
    %p75 = por %p73, %p74
    %p76 = scmp.ne.s32.totalorder %s68, %s71
    %p77 = scmp.eq.s32.totalorder %s9, 0
    %p78 = por %p76, %p77
    %p79 = scmp.ne.s32.totalorder %s68, %s71
    %p80 = scmp.eq.s32.totalorder %s14, 1
    %p81 = por %p79, %p80
    %p82 = scmp.ne.s32.totalorder %s71, %s72
    %p83 = scmp.eq.s32.totalorder %s14, 0
    %p84 = por %p82, %p83
    %p85 = scmp.ne.s32.totalorder %s71, %s72
    %p86 = scmp.eq.s32.totalorder %s15, 1
    %p87 = por %p85, %p86
    %p89 = scmp.ne.s32.totalorder %s72, %s88
    %p90 = scmp.eq.s32.totalorder %s15, 0
    %p91 = por %p89, %p90
    %s92 = ssub.s32 %s17, %s31
    %p93 = scmp.eq.s32.totalorder %s92, 0
    %s95 = sadd.s32 %s94, 1
    %s96 = scalar_select %p93, %s94, %s95
    %p99 = pneg %p93
    %p100 = scmp.eq.s32.totalorder %s9, 1
    %p101 = por %p99, %p100
    %p102 = scmp.ne.s32.totalorder %s94, %s97
    %p103 = scmp.eq.s32.totalorder %s9, 0
    %p104 = por %p102, %p103
    %p105 = scmp.ne.s32.totalorder %s94, %s97
    %p106 = scmp.eq.s32.totalorder %s14, 1
    %p107 = por %p105, %p106
    %p108 = scmp.ne.s32.totalorder %s97, %s98
    %p109 = scmp.eq.s32.totalorder %s14, 0
    %p110 = por %p108, %p109
    %p111 = scmp.ne.s32.totalorder %s97, %s98
    %p112 = scmp.eq.s32.totalorder %s15, 1
    %p113 = por %p111, %p112
    %p115 = scmp.ne.s32.totalorder %s98, %s114
    %p116 = scmp.eq.s32.totalorder %s15, 0
    %p117 = por %p115, %p116
    %s118 = ssub.s32 %s16, %s35
    %s119 = ssub.s32 %s17, %s31
    %s120 = sor.u32 %s118, %s119
    %p121 = scmp.eq.s32.totalorder %s120, 0
    %s123 = sadd.s32 %s122, 1
    %s124 = scalar_select %p121, %s122, %s123
    %p127 = pneg %p121
    %p128 = scmp.eq.s32.totalorder %s9, 1
    %p129 = por %p127, %p128
    %p130 = scmp.ne.s32.totalorder %s122, %s125
    %p131 = scmp.eq.s32.totalorder %s9, 0
    %p132 = por %p130, %p131
    %p133 = scmp.ne.s32.totalorder %s122, %s125
    %p134 = scmp.eq.s32.totalorder %s14, 1
    %p135 = por %p133, %p134
    %p136 = scmp.ne.s32.totalorder %s125, %s126
    %p137 = scmp.eq.s32.totalorder %s14, 0
    %p138 = por %p136, %p137
    %p139 = scmp.ne.s32.totalorder %s125, %s126
    %p140 = scmp.eq.s32.totalorder %s15, 1
    %p141 = por %p139, %p140
    %p143 = scmp.ne.s32.totalorder %s126, %s142
    %p144 = scmp.eq.s32.totalorder %s15, 0
    %p145 = por %p143, %p144
    %p146 = scmp.le.s32.totalorder 1, %s9
    %p147 = scmp.lt.s32.totalorder %s9, 3
    %p148 = pnand %p146, %p147
    %p149 = pneg %p148
    // Predicated region
    $region9: #{input_embedding_forward.1} parent=5 // pred_check
      _
    $region10: #{input_embedding_forward.1} parent=5 // pred_check_branch
      %151 = sbr.rel (%p148) target = $region12
    $region11: #{input_embedding_forward.1} parent=5 // pred_region
      %s152 = ssub.s32 %s9, 1
      // Predicated region
      $region13: #{input_embedding_forward.1} parent=11 // pred_check
        %p153 = pneg %p84
      $region14: #{input_embedding_forward.1} parent=11 // pred_check_branch
        %155 = sbr.rel (%p153) target = $region16
      $region15: #{input_embedding_forward.1} parent=11 // pred_region
        %s156 = smul.u32 16, %s21
        %p157 = scmp.lt.s32.totalorder %s156, 15
        %s158 = scalar_select %p157, %s156, 15
        %s159 = smul.addr %s158, 4
        %s160 = scalar_lea.vmem %s1, %s159
        %s161 = smul.u32 16, %s21
      $region16: #{input_embedding_forward.1} parent=11 // pred_fallthru
        _
      // Predicated region
      $region17: #{input_embedding_forward.1} parent=11 // pred_check
        %p162 = pneg %p110
      $region18: #{input_embedding_forward.1} parent=11 // pred_check_branch
        %164 = sbr.rel (%p162) target = $region20
      $region19: #{input_embedding_forward.1} parent=11 // pred_region
        %s165 = smul.u32 2, %s20
        %p166 = scmp.lt.s32.totalorder %s165, 1
        %s167 = scalar_select %p166, %s165, 1
        %s168 = smul.addr %s167, 8
        %s169 = scalar_lea.vmem %s2, %s168
        %s170 = smul.u32 2, %s20
      $region20: #{input_embedding_forward.1} parent=11 // pred_fallthru
        _
    $region12: #{input_embedding_forward.1} parent=5 // pred_fallthru
      _
    %p171 = scmp.lt.s32.totalorder %s9, 2
    // Predicated region
    $region21: #{input_embedding_forward.1} parent=5 // pred_check
      %p172 = pneg %p171
    $region22: #{input_embedding_forward.1} parent=5 // pred_check_branch
      %174 = sbr.rel (%p172) target = $region24
    $region23: #{input_embedding_forward.1} parent=5 // pred_region
      // Predicated region
      $region25: #{input_embedding_forward.1} parent=23 // pred_check
        %p175 = pneg %p52
      $region26: #{input_embedding_forward.1} parent=23 // pred_check_branch
        %177 = sbr.rel (%p175) target = $region28
      $region27: #{input_embedding_forward.1} parent=23 // pred_region
        %s178 = smul.u32 2, %s17
        %p179 = scmp.lt.s32.totalorder %s16, 1
        %s180 = scalar_select %p179, %s16, 1
        %p181 = scmp.lt.s32.totalorder %s178, 1
        %s182 = scalar_select %p181, %s178, 1
        %p183 = scmp.lt.s32.totalorder %s18, 0
        %s184 = scalar_select %p183, %s18, 0
        %s185 = sadd.s32 %s184, %s182
        %s186 = smul.addr %s180, 2
        %s187 = sadd.s32 %s185, %s186
        %s188 = smul.addr %s187, 4
        %s189 = scalar_lea.vmem %s0, %s188
        %s190 = smul.u32 2, %s17
      $region28: #{input_embedding_forward.1} parent=23 // pred_fallthru
        _
    $region24: #{input_embedding_forward.1} parent=5 // pred_fallthru
      _
    %p191 = scmp.le.s32.totalorder 1, %s9
    %p192 = scmp.lt.s32.totalorder %s9, 3
    %p193 = pnand %p191, %p192
    %p194 = pneg %p193
    // Predicated region
    $region29: #{input_embedding_forward.1} parent=5 // pred_check
      _
    $region30: #{input_embedding_forward.1} parent=5 // pred_check_branch
      %196 = sbr.rel (%p193) target = $region32
    $region31: #{input_embedding_forward.1} parent=5 // pred_region
      %s197 = ssub.s32 %s9, 1
      %s198 = smul.u32 2, %s20
      %p199 = scmp.lt.s32.totalorder %s19, 1
      %s200 = scalar_select %p199, %s19, 1
      %p201 = scmp.lt.s32.totalorder %s198, 1
      %s202 = scalar_select %p201, %s198, 1
      %p203 = scmp.lt.s32.totalorder %s21, 0
      %s204 = scalar_select %p203, %s21, 0
      %s205 = sadd.s32 %s204, %s202
      %s206 = smul.addr %s200, 2
      %s207 = sadd.s32 %s205, %s206
      %s208 = smul.addr %s207, 4
      %s209 = scalar_lea.vmem %s0, %s208
      %p210 = pneg %p58
      %p211 = pneg %p55
      %s212 = smul.u32 16, %s21
      %p213 = scmp.lt.s32.totalorder %s212, 15
      %s214 = scalar_select %p213, %s212, 15
      %s215 = smul.addr %s214, 4
      %s216 = scalar_lea.vmem %s1, %s215
      %p217 = pneg %p84
      %p218 = pneg %p81
      %s219 = smul.u32 2, %s20
      %p220 = scmp.lt.s32.totalorder %s219, 1
      %s221 = scalar_select %p220, %s219, 1
      %s222 = smul.addr %s221, 8
      %s223 = scalar_lea.vmem %s2, %s222
      %p224 = pneg %p110
      %p225 = pneg %p107
      %p226 = pneg %p138
      %p227 = pneg %p135
      %s228 = smul.u32 2, %s20
      %p229 = scmp.lt.s32.totalorder %s19, 1
      %s230 = scalar_select %p229, %s19, 1
      %p231 = scmp.lt.s32.totalorder %s228, 1
      %s232 = scalar_select %p231, %s228, 1
      %s233 = smul.addr %s230, 2
      %s234 = sadd.s32 %s232, %s233
      %s235 = smul.addr %s234, 8
      %s236 = scalar_lea.vmem %s3, %s235
      %s237 = smul.u32 2, %s20
      %p238 = scmp.lt.s32.totalorder %s19, 1
      %s239 = scalar_select %p238, %s19, 1
      %p240 = scmp.lt.s32.totalorder %s237, 1
      %s241 = scalar_select %p240, %s237, 1
      %p242 = scmp.lt.s32.totalorder %s21, 0
      %s243 = scalar_select %p242, %s21, 0
      %s244 = sadd.s32 %s243, %s241
      %s245 = smul.addr %s239, 2
      %s246 = sadd.s32 %s244, %s245
      %s247 = smul.addr %s246, 4
      %s248 = scalar_lea.vmem %s0, %s247
      %s249 = smul.u32 2, %s20
      %s250 = smul.u32 16, %s21
      %p251 = scmp.lt.s32.totalorder %s250, 15
      %s252 = scalar_select %p251, %s250, 15
      %s253 = smul.addr %s252, 4
      %s254 = scalar_lea.vmem %s1, %s253
      %s255 = smul.u32 16, %s21
      %s256 = smul.u32 2, %s20
      %p257 = scmp.lt.s32.totalorder %s256, 1
      %s258 = scalar_select %p257, %s256, 1
      %s259 = smul.addr %s258, 8
      %s260 = scalar_lea.vmem %s2, %s259
      %s261 = smul.u32 2, %s20
      %s262 = smul.u32 2, %s20
      %p263 = scmp.lt.s32.totalorder %s19, 1
      %s264 = scalar_select %p263, %s19, 1
      %p265 = scmp.lt.s32.totalorder %s262, 1
      %s266 = scalar_select %p265, %s262, 1
      %s267 = smul.addr %s264, 2
      %s268 = sadd.s32 %s266, %s267
      %s269 = smul.addr %s268, 8
      %s270 = scalar_lea.vmem %s3, %s269
      %s271 = smul.u32 2, %s20
      %v273 = vld [vmem:[%s248] sm:$0xf]
      %v274 = vld [vmem:[%s248 + $0x4] sm:$0xf]
      %v275 = vld [vmem:[%s254] sm:$0xf]
      %v276 = vld [vmem:[%s254 + $0x4] sm:$0xf]
      %v277 = vld [vmem:[%s254 + $0x8] sm:$0xf]
      %v278 = vld [vmem:[%s254 + $0xc] sm:$0xf]
      %v279 = vld [vmem:[%s254 + $0x10] sm:$0xf]
      %v280 = vld [vmem:[%s254 + $0x14] sm:$0xf]
      %v281 = vld [vmem:[%s254 + $0x18] sm:$0xf]
      %v282 = vld [vmem:[%s254 + $0x1c] sm:$0xf]
      %v283 = vld [vmem:[%s254 + $0x20] sm:$0xf]
      %v284 = vld [vmem:[%s254 + $0x24] sm:$0xf]
      %v285 = vld [vmem:[%s254 + $0x28] sm:$0xf]
      %v286 = vld [vmem:[%s254 + $0x2c] sm:$0xf]
      %v287 = vld [vmem:[%s254 + $0x30] sm:$0xf]
      %v288 = vld [vmem:[%s254 + $0x34] sm:$0xf]
      %v289 = vld [vmem:[%s254 + $0x38] sm:$0xf]
      %v290 = vld [vmem:[%s254 + $0x3c] sm:$0xf]
      %v293 = vunpack.c.l.b16 %v273
      %v294 = vunpack.c.l.b16 %v274
      %v295 = vpack.c.b16 %v294, %v293
      %v313 = vunpack.c.l.b16 %v275
      %v314 = vunpack.c.l.b16 %v276
      %v315 = vunpack.c.l.b16 %v277
      %v316 = vunpack.c.l.b16 %v278
      %v317 = vunpack.c.l.b16 %v279
      %v318 = vunpack.c.l.b16 %v280
      %v319 = vunpack.c.l.b16 %v281
      %v320 = vunpack.c.l.b16 %v282
      %v321 = vunpack.c.l.b16 %v283
      %v322 = vunpack.c.l.b16 %v284
      %v323 = vunpack.c.l.b16 %v285
      %v324 = vunpack.c.l.b16 %v286
      %v325 = vunpack.c.l.b16 %v287
      %v326 = vunpack.c.l.b16 %v288
      %v327 = vunpack.c.l.b16 %v289
      %v328 = vunpack.c.l.b16 %v290
      %v329 = vpack.c.b16 %v314, %v313
      %v330 = vpack.c.b16 %v316, %v315
      %v331 = vpack.c.b16 %v318, %v317
      %v332 = vpack.c.b16 %v320, %v319
      %v333 = vpack.c.b16 %v322, %v321
      %v334 = vpack.c.b16 %v324, %v323
      %v335 = vpack.c.b16 %v326, %v325
      %v336 = vpack.c.b16 %v328, %v327
      %345 = vmatprep.subr.bf16.mxu0 0
      %346 = vmatpush1.bf16.msra.mxu0 %v329
      %347 = vmatprep.subr.bf16.mxu0 0
      %348 = vmatpush1.bf16.msra.mxu0 %v330
      %349 = vmatprep.subr.bf16.mxu0 0
      %350 = vmatpush1.bf16.msra.mxu0 %v331
      %351 = vmatprep.subr.bf16.mxu0 0
      %352 = vmatpush1.bf16.msra.mxu0 %v332
      %353 = vmatprep.subr.bf16.mxu0 0
      %354 = vmatpush1.bf16.msra.mxu0 %v333
      %355 = vmatprep.subr.bf16.mxu0 0
      %356 = vmatpush1.bf16.msra.mxu0 %v334
      %357 = vmatprep.subr.bf16.mxu0 0
      %358 = vmatpush1.bf16.msra.mxu0 %v335
      %359 = vmatprep.subr.bf16.mxu0 0
      %360 = vmatpush1.bf16.msra.mxu0 %v336
      %361 = vmatprep.subr.bf16.mxu0 0
      %362 = vmatpush1.bf16.msra.mxu0 0
      %363 = vmatprep.subr.bf16.mxu0 0
      %364 = vmatpush1.bf16.msra.mxu0 0
      %365 = vmatprep.subr.bf16.mxu0 0
      %366 = vmatpush1.bf16.msra.mxu0 0
      %367 = vmatprep.subr.bf16.mxu0 0
      %368 = vmatpush1.bf16.msra.mxu0 0
      %369 = vmatprep.subr.bf16.mxu0 0
      %370 = vmatpush1.bf16.msra.mxu0 0
      %371 = vmatprep.subr.bf16.mxu0 0
      %372 = vmatpush1.bf16.msra.mxu0 0
      %373 = vmatprep.subr.bf16.mxu0 0
      %374 = vmatpush1.bf16.msra.mxu0 0
      %375 = vmatprep.subr.bf16.mxu0 0
      %376 = vmatpush1.bf16.msra.mxu0 0
      %377 = vmatprep.mubr.bf16.mxu0 0
      %378 = vmatmul.mubr.bf16.gmra.mrb[0].mxu0 %v295
      %v379 = vpop.f32.mrb[0].mxu0
      %v380 = vadd.f32 0.0, %v379
      %v381 = vpop.f32.mrb[0].mxu0
      %v382 = vpop.f32.mrb[0].mxu0
      %v383 = vadd.f32 0.0, %v382
      %v384 = vpop.f32.mrb[0].mxu0
      %385 = vdwg.mxu0
      %p386 = scmp.eq.s32.totalorder %s21, 0
      // Predicated region
      $region33: #{input_embedding_forward.1} parent=31 // pred_check
        %p387 = pneg %p386
      $region34: #{input_embedding_forward.1} parent=31 // pred_check_branch
        %389 = sbr.rel (%p387) target = $region36
      $region35: #{input_embedding_forward.1} parent=31 // pred_region
        %v390 = vld [vmem:[%s260] sm:$0xff]
        %v391 = vld [vmem:[%s260 + $0x8] sm:$0xff]
        %v392 = vadd.f32 %v380, %v390
        %v393 = vadd.f32 %v383, %v391
        %394 = vst [vmem:[%s270] sm:$0xff] %v392
        %395 = vst [vmem:[%s270 + $0x8] sm:$0xff] %v393
      $region36: #{input_embedding_forward.1} parent=31 // pred_fallthru
        _
      %p396 = scmp.gt.s32.totalorder %s21, 0
      // Predicated region
      $region37: #{input_embedding_forward.1} parent=31 // pred_check
        %p397 = pneg %p396
      $region38: #{input_embedding_forward.1} parent=31 // pred_check_branch
        %399 = sbr.rel (%p397) target = $region40
      $region39: #{input_embedding_forward.1} parent=31 // pred_region
        %v400 = vld [vmem:[%s270] sm:$0xff]
        %v401 = vld [vmem:[%s270 + $0x8] sm:$0xff]
        %v402 = vadd.f32 %v400, %v380
        %v403 = vadd.f32 %v401, %v383
        %404 = vst [vmem:[%s270] sm:$0xff] %v402
        %405 = vst [vmem:[%s270 + $0x8] sm:$0xff] %v403
      $region40: #{input_embedding_forward.1} parent=31 // pred_fallthru
        _
      %s406 = smul.u32 2, %s20
      %p407 = scmp.lt.s32.totalorder %s19, 1
      %s408 = scalar_select %p407, %s19, 1
      %p409 = scmp.lt.s32.totalorder %s406, 1
      %s410 = scalar_select %p409, %s406, 1
      %s411 = smul.addr %s408, 2
      %s412 = sadd.s32 %s410, %s411
      %s413 = smul.addr %s412, 8
      %s414 = scalar_lea.vmem %s3, %s413
      // Predicated region
      $region41: #{input_embedding_forward.1} parent=31 // pred_check
        %p415 = pneg %p135
      $region42: #{input_embedding_forward.1} parent=31 // pred_check_branch
        %417 = sbr.rel (%p415) target = $region44
      $region43: #{input_embedding_forward.1} parent=31 // pred_region
        %s418 = smul.u32 2, %s20
      $region44: #{input_embedding_forward.1} parent=31 // pred_fallthru
        _
    $region32: #{input_embedding_forward.1} parent=5 // pred_fallthru
      _
    %p419 = scmp.le.s32.totalorder 2, %s9
    // Predicated region
    $region45: #{input_embedding_forward.1} parent=5 // pred_check
      %p420 = pneg %p419
    $region46: #{input_embedding_forward.1} parent=5 // pred_check_branch
      %422 = sbr.rel (%p420) target = $region48
    $region47: #{input_embedding_forward.1} parent=5 // pred_region
      %s423 = ssub.s32 %s9, 2
      // Predicated region
      $region49: #{input_embedding_forward.1} parent=47 // pred_check
        %p424 = pneg %p141
      $region50: #{input_embedding_forward.1} parent=47 // pred_check_branch
        %426 = sbr.rel (%p424) target = $region52
      $region51: #{input_embedding_forward.1} parent=47 // pred_region
        %s427 = smul.u32 2, %s23
        %p428 = scmp.lt.s32.totalorder %s22, 1
        %s429 = scalar_select %p428, %s22, 1
        %p430 = scmp.lt.s32.totalorder %s427, 1
        %s431 = scalar_select %p430, %s427, 1
        %s432 = smul.addr %s429, 2
        %s433 = sadd.s32 %s431, %s432
        %s434 = smul.addr %s433, 8
        %s435 = scalar_lea.vmem %s3, %s434
      $region52: #{input_embedding_forward.1} parent=47 // pred_fallthru
        _
    $region48: #{input_embedding_forward.1} parent=5 // pred_fallthru
      _
  $region6: #{input_embedding_forward.1} parent=0 // loop_footer
    %s13 = sadd.s32 1, %s9
  $region7: #{input_embedding_forward.1} parent=0 // loop_footer_branch
    %8 = sbr.rel target = $region3
  $region8: #{input_embedding_forward.1} parent=0 // loop_exit
    _

</llo_original>
